<compile_context>
chip_gen: v6e
topology: v6e:2x2x1
jax: 0.10.0
libtpu: 0.0.40
codegen_flags: <defaults>
</compile_context>

<pallas_src>
import jax
import jax.numpy as jnp
from jax.experimental import pallas as pl
from jax.experimental.pallas import tpu as pltpu


# ----------------------------------------------------------------------------
# Pallas kernel: complex contraction for one (corner, M-tile)
#   out[b, o, m] = sum_i a[b, i, m] * w[i, o, m]   (complex multiply)
# a refs are laid out (Cin, B, TM); w refs (Cin, Cout, TM); out (B, Cout, TM).
# Gauss trick: re = k1 - ai*(wr+wi), im = k1 + ar*(wi-wr), k1 = wr*(ar+ai).
# ----------------------------------------------------------------------------
def _corner_contract_kernel(a_re_ref, a_im_ref, w_re_ref, w_sum_ref, w_diff_ref,
                            o_re_ref, o_im_ref):
    Cin, B, TM = a_re_ref.shape
    Cout = w_re_ref.shape[1]

    def body(i, carry):
        acc_re, acc_im = carry
        ar = a_re_ref[i]                       # (B, TM)
        ai = a_im_ref[i]                       # (B, TM)
        wr = w_re_ref[i][None, :, :]           # (1, Cout, TM)
        ws = w_sum_ref[i][None, :, :]          # (1, Cout, TM)
        wd = w_diff_ref[i][None, :, :]         # (1, Cout, TM)

        k1 = (ar + ai)[:, None, :] * wr        # (B, Cout, TM)  -- mult 1
        acc_re = acc_re + (k1 - ai[:, None, :] * ws)            # -- mult 2
        acc_im = acc_im + (k1 + ar[:, None, :] * wd)            # -- mult 3
        return acc_re, acc_im

    zero = jnp.zeros((B, Cout, TM), jnp.float32)
    unroll = Cin if Cin <= 8 else 8
    acc_re, acc_im = jax.lax.fori_loop(0, Cin, body, (zero, zero),
                                       unroll=unroll)
    o_re_ref[...] = acc_re
    o_im_ref[...] = acc_im


def _choose_tm(B, Cin, Cout, M, budget_bytes=24 << 20):
    """Pick a lane-dense M-tile (multiple of 128) fitting a double-buffered
    VMEM budget that is safe on v7x (64 MiB physical) as well as v5e/v6e."""
    per_lane = 4 * (2 * Cin * B + 3 * Cin * Cout + 2 * B * Cout)  # bytes / lane / buf
    tm_cap = (budget_bytes // (2 * per_lane)) // 128 * 128
    tm_cap = int(max(128, min(tm_cap, 512)))
    m_pad128 = -(-M // 128) * 128
    if m_pad128 <= tm_cap:
        return m_pad128, m_pad128
    n_tiles = -(-m_pad128 // tm_cap)
    tm = -(-m_pad128 // (n_tiles * 128)) * 128
    return tm, tm * n_tiles


def contract_corners_pallas(a_re, a_im, w_re, w_sum, w_diff, tm):
    """a_*: (4, Cin, B, M) f32, w_*: (4, Cin, Cout, M) f32, M % tm == 0.
    Returns (o_re, o_im), each (4, B, Cout, M) f32."""
    n_corners, Cin, B, M = a_re.shape
    Cout = w_re.shape[2]
    assert M % tm == 0
    n_mt = M // tm

    a_spec = pl.BlockSpec((pl.Squeezed(), Cin, B, tm), lambda c, t: (c, 0, 0, t))
    w_spec = pl.BlockSpec((pl.Squeezed(), Cin, Cout, tm), lambda c, t: (c, 0, 0, t))
    o_spec = pl.BlockSpec((pl.Squeezed(), B, Cout, tm), lambda c, t: (c, 0, 0, t))

    out_struct = jax.ShapeDtypeStruct((n_corners, B, Cout, M), jnp.float32)

    # Explicit VMEM limit: double-buffered per-step footprint + slack,
    # clamped so it is valid on every generation (v7x has 64 MiB physical).
    per_step = 4 * tm * (2 * Cin * B + 3 * Cin * Cout + 2 * B * Cout)
    vmem_limit = int(min(max(2 * per_step + (4 << 20), 16 << 20), 48 << 20))

    flops = 8 * n_corners * B * Cin * Cout * M            # ~8 real flops / complex MAC
    bytes_accessed = 4 * n_corners * M * (2 * Cin * B + 3 * Cin * Cout + 2 * B * Cout)

    o_re, o_im = pl.pallas_call(
        _corner_contract_kernel,
        grid=(n_corners, n_mt),
        in_specs=[a_spec, a_spec, w_spec, w_spec, w_spec],
        out_specs=[o_spec, o_spec],
        out_shape=(out_struct, out_struct),
        compiler_params=pltpu.CompilerParams(
            dimension_semantics=("parallel", "parallel"),
            vmem_limit_bytes=vmem_limit),
        cost_estimate=pl.CostEstimate(flops=flops, transcendentals=0,
                                      bytes_accessed=bytes_accessed),
    )(a_re, a_im, w_re, w_sum, w_diff)
    return o_re, o_im


# ----------------------------------------------------------------------------
# Module-equivalent wrapper
# ----------------------------------------------------------------------------
class FactorizedSpectralConv3dPallas:
    def __init__(self, in_channels, out_channels, modes1, modes2, modes3,
                 n_layers=1, bias=True, scale='auto', fft_norm='backward',
                 key=None):
        self.in_channels = in_channels
        self.out_channels = out_channels
        self.modes1 = modes1
        self.modes2 = modes2
        self.modes3 = modes3
        self.n_layers = n_layers
        self.fft_norm = fft_norm

        if scale == 'auto':
            scale = 1.0 / (in_channels * out_channels)

        if key is None:
            key = jax.random.PRNGKey(0)
        k1, k2, k3 = jax.random.split(key, 3)

        # TODO(synk): the tltorch CP factorization is represented here by its
        # dense (reconstructed) complex weight tensor; forward semantics are
        # identical given the effective weights.
        wshape = (4 * n_layers, in_channels, out_channels, modes1, modes2, modes3)
        self.weight_re = scale * jax.random.normal(k1, wshape, dtype=jnp.float32)
        self.weight_im = scale * jax.random.normal(k2, wshape, dtype=jnp.float32)

        if bias:
            self.bias = scale * jax.random.normal(
                k3, (out_channels, 1, 1, 1), dtype=jnp.float32)
        else:
            self.bias = jnp.float32(0.0)

    def __call__(self, x, indices=0):
        B, C, H, W, D = x.shape
        m1, m2, m3 = self.modes1, self.modes2, self.modes3
        assert m1 <= H and m2 <= W and m3 <= D // 2 + 1, \
            "modes must not exceed the available Fourier modes"
        in_dtype = x.dtype
        M = m1 * m2 * m3
        Cout = self.out_channels

        x_fft = jnp.fft.rfftn(x.astype(jnp.float32), axes=(2, 3, 4),
                              norm=self.fft_norm)

        # (Cin, B, H, W, Dr) so the kernel's Cin-accumulation axis is leading.
        xf = jnp.transpose(x_fft, (1, 0, 2, 3, 4))
        corners = jnp.stack([
            xf[:, :, :m1, :m2, :m3],
            xf[:, :, -m1:, :m2, :m3],
            xf[:, :, :m1, -m2:, :m3],
            xf[:, :, -m1:, -m2:, :m3],
        ], axis=0).reshape(4, C, B, M)          # (4, Cin, B, M) complex64

        TM, M_total = _choose_tm(B, C, Cout, M)

        a_re = jnp.real(corners)
        a_im = jnp.imag(corners)

        w_re = self.weight_re[4 * indices:4 * indices + 4].reshape(4, C, Cout, M)
        w_im = self.weight_im[4 * indices:4 * indices + 4].reshape(4, C, Cout, M)

        if M_total > M:
            pad = ((0, 0), (0, 0), (0, 0), (0, M_total - M))
            a_re = jnp.pad(a_re, pad)
            a_im = jnp.pad(a_im, pad)
            w_re = jnp.pad(w_re, pad)
            w_im = jnp.pad(w_im, pad)

        # Gauss-trick weight combinations, computed once outside the kernel.
        w_sum = w_re + w_im
        w_diff = w_im - w_re

        o_re, o_im = contract_corners_pallas(a_re, a_im, w_re, w_sum, w_diff, TM)

        o = jax.lax.complex(o_re[..., :M], o_im[..., :M]).reshape(
            4, B, Cout, m1, m2, m3)

        out_fft = jnp.zeros((B, Cout, H, W, D // 2 + 1), dtype=jnp.complex64)
        # PyTorch writes corners in order 0,1,2,1,3 (corner 1 written twice).
        # Order 0,2,1,3 with single writes yields the identical final state
        # while removing one full-array dynamic-update-slice.
        out_fft = out_fft.at[:, :, :m1, :m2, :m3].set(o[0])
        out_fft = out_fft.at[:, :, :m1, -m2:, :m3].set(o[2])
        out_fft = out_fft.at[:, :, -m1:, :m2, :m3].set(o[1])
        out_fft = out_fft.at[:, :, -m1:, -m2:, :m3].set(o[3])

        x_out = jnp.fft.irfftn(out_fft, s=(H, W, D), axes=(2, 3, 4),
                               norm=self.fft_norm)
        # bias (Cout,1,1,1) broadcasts against (B, Cout, H, W, D); added in f32
        # before the downcast so the output keeps the input dtype.
        x_out = x_out + self.bias
        return x_out.astype(in_dtype)


# ----------------------------------------------------------------------------
# Pure-JAX reference (mirrors the PyTorch module) for a correctness check.
# ----------------------------------------------------------------------------
def _reference_forward(conv, x, indices=0):
    B, C, H, W, D = x.shape
    m1, m2, m3 = conv.modes1, conv.modes2, conv.modes3
    x_fft = jnp.fft.rfftn(x.astype(jnp.float32), axes=(2, 3, 4),
                          norm=conv.fft_norm)
    w = (conv.weight_re + 1j * conv.weight_im)[4 * indices:4 * indices + 4]

    def ctr(a, wc):
        return jnp.einsum('bixyz,ioxyz->boxyz', a, wc)

    out_fft = jnp.zeros((B, conv.out_channels, H, W, D // 2 + 1),
                        dtype=jnp.complex64)
    out_fft = out_fft.at[:, :, :m1, :m2, :m3].set(ctr(x_fft[:, :, :m1, :m2, :m3], w[0]))
    out_fft = out_fft.at[:, :, -m1:, :m2, :m3].set(ctr(x_fft[:, :, -m1:, :m2, :m3], w[1]))
    out_fft = out_fft.at[:, :, :m1, -m2:, :m3].set(ctr(x_fft[:, :, :m1, -m2:, :m3], w[2]))
    out_fft = out_fft.at[:, :, -m1:, :m2, :m3].set(ctr(x_fft[:, :, -m1:, :m2, :m3], w[1]))
    out_fft = out_fft.at[:, :, -m1:, -m2:, :m3].set(ctr(x_fft[:, :, -m1:, -m2:, :m3], w[3]))
    y = jnp.fft.irfftn(out_fft, s=(H, W, D), axes=(2, 3, 4), norm=conv.fft_norm)
    return (y + conv.bias).astype(x.dtype)


if __name__ == "__main__":
    key = jax.random.PRNGKey(0)
    k_x, k_params = jax.random.split(key)

    B, Cin, Cout = 2, 4, 4
    H, Wd, D = 16, 16, 16
    m1, m2, m3 = 4, 4, 8        # M = 128 -> one lane-dense tile per corner

    conv = FactorizedSpectralConv3dPallas(Cin, Cout, m1, m2, m3,
                                          n_layers=1, bias=True,
                                          key=k_params)

    x = jax.random.normal(k_x, (B, Cin, H, Wd, D), dtype=jnp.float32)
    y = conv(x, indices=0)
    jax.block_until_ready(y)
    assert y.shape == (B, Cout, H, Wd, D)

    y_ref = _reference_forward(conv, x, indices=0)
    err = float(jnp.max(jnp.abs(y - y_ref)))
    assert err < 1e-3, f"max abs err {err}"

    print("KERNEL_OK")
</pallas_src>

<mosaic_0001>
module attributes {stable_mosaic.version = 11 : i64} {
  func.func @_corner_contract_kernel(%arg0: i32, %arg1: i32, %arg2: memref<1x4x2x128xf32, #tpu.memory_space<vmem>>, %arg3: memref<1x4x2x128xf32, #tpu.memory_space<vmem>>, %arg4: memref<1x4x4x128xf32, #tpu.memory_space<vmem>>, %arg5: memref<1x4x4x128xf32, #tpu.memory_space<vmem>>, %arg6: memref<1x4x4x128xf32, #tpu.memory_space<vmem>>, %arg7: memref<1x2x4x128xf32, #tpu.memory_space<vmem>>, %arg8: memref<1x2x4x128xf32, #tpu.memory_space<vmem>>) attributes {dimension_semantics = [#tpu.dimension_semantics<parallel>, #tpu.dimension_semantics<parallel>], iteration_bounds = array<i64: 4, 1>, scalar_prefetch = 0 : i64, scratch_operands = 0 : i64, tpu.core_type = #tpu.core_type<tc>, window_params = [{transform_indices = @transform_0, window_bounds = array<i64: 1, 4, 2, 128>}, {transform_indices = @transform_1, window_bounds = array<i64: 1, 4, 2, 128>}, {transform_indices = @transform_2, window_bounds = array<i64: 1, 4, 4, 128>}, {transform_indices = @transform_3, window_bounds = array<i64: 1, 4, 4, 128>}, {transform_indices = @transform_4, window_bounds = array<i64: 1, 4, 4, 128>}, {transform_indices = @transform_5, window_bounds = array<i64: 1, 2, 4, 128>}, {transform_indices = @transform_6, window_bounds = array<i64: 1, 2, 4, 128>}]} {
    %cst = arith.constant 0.000000e+00 : f32
    %0 = vector.broadcast %cst : f32 to vector<2x4x128xf32>
    %c0_i32 = arith.constant 0 : i32
    %c0 = arith.constant 0 : index
    %1 = arith.index_cast %c0_i32 : i32 to index
    %c0_0 = arith.constant 0 : index
    %c0_1 = arith.constant 0 : index
    %2 = vector.load %arg2[%c0, %1, %c0_0, %c0_1] : memref<1x4x2x128xf32, #tpu.memory_space<vmem>>, vector<1x1x2x128xf32>
    %3 = vector.shape_cast %2 : vector<1x1x2x128xf32> to vector<2x128xf32>
    %c0_2 = arith.constant 0 : index
    %4 = arith.index_cast %c0_i32 : i32 to index
    %c0_3 = arith.constant 0 : index
    %c0_4 = arith.constant 0 : index
    %5 = vector.load %arg3[%c0_2, %4, %c0_3, %c0_4] : memref<1x4x2x128xf32, #tpu.memory_space<vmem>>, vector<1x1x2x128xf32>
    %6 = vector.shape_cast %5 : vector<1x1x2x128xf32> to vector<2x128xf32>
    %c0_5 = arith.constant 0 : index
    %7 = arith.index_cast %c0_i32 : i32 to index
    %c0_6 = arith.constant 0 : index
    %c0_7 = arith.constant 0 : index
    %8 = vector.load %arg4[%c0_5, %7, %c0_6, %c0_7] : memref<1x4x4x128xf32, #tpu.memory_space<vmem>>, vector<1x1x4x128xf32>
    %9 = vector.shape_cast %8 : vector<1x1x4x128xf32> to vector<4x128xf32>
    %10 = vector.shape_cast %9 : vector<4x128xf32> to vector<1x4x128xf32>
    %c0_8 = arith.constant 0 : index
    %11 = arith.index_cast %c0_i32 : i32 to index
    %c0_9 = arith.constant 0 : index
    %c0_10 = arith.constant 0 : index
    %12 = vector.load %arg5[%c0_8, %11, %c0_9, %c0_10] : memref<1x4x4x128xf32, #tpu.memory_space<vmem>>, vector<1x1x4x128xf32>
    %13 = vector.shape_cast %12 : vector<1x1x4x128xf32> to vector<4x128xf32>
    %14 = vector.shape_cast %13 : vector<4x128xf32> to vector<1x4x128xf32>
    %c0_11 = arith.constant 0 : index
    %15 = arith.index_cast %c0_i32 : i32 to index
    %c0_12 = arith.constant 0 : index
    %c0_13 = arith.constant 0 : index
    %16 = vector.load %arg6[%c0_11, %15, %c0_12, %c0_13] : memref<1x4x4x128xf32, #tpu.memory_space<vmem>>, vector<1x1x4x128xf32>
    %17 = vector.shape_cast %16 : vector<1x1x4x128xf32> to vector<4x128xf32>
    %18 = vector.shape_cast %17 : vector<4x128xf32> to vector<1x4x128xf32>
    %19 = arith.addf %3, %6 : vector<2x128xf32>
    %20 = vector.shape_cast %19 : vector<2x128xf32> to vector<2x1x128xf32>
    %21 = vector.broadcast %20 : vector<2x1x128xf32> to vector<2x4x128xf32>
    %22 = vector.broadcast %10 : vector<1x4x128xf32> to vector<2x4x128xf32>
    %23 = arith.mulf %21, %22 : vector<2x4x128xf32>
    %24 = vector.shape_cast %6 : vector<2x128xf32> to vector<2x1x128xf32>
    %25 = vector.broadcast %24 : vector<2x1x128xf32> to vector<2x4x128xf32>
    %26 = vector.broadcast %14 : vector<1x4x128xf32> to vector<2x4x128xf32>
    %27 = arith.mulf %25, %26 : vector<2x4x128xf32>
    %28 = arith.subf %23, %27 : vector<2x4x128xf32>
    %29 = arith.addf %0, %28 : vector<2x4x128xf32>
    %30 = vector.shape_cast %3 : vector<2x128xf32> to vector<2x1x128xf32>
    %31 = vector.broadcast %30 : vector<2x1x128xf32> to vector<2x4x128xf32>
    %32 = vector.broadcast %18 : vector<1x4x128xf32> to vector<2x4x128xf32>
    %33 = arith.mulf %31, %32 : vector<2x4x128xf32>
    %34 = arith.addf %23, %33 : vector<2x4x128xf32>
    %35 = arith.addf %0, %34 : vector<2x4x128xf32>
    %c1_i32 = arith.constant 1 : i32
    %c0_14 = arith.constant 0 : index
    %36 = arith.index_cast %c1_i32 : i32 to index
    %c0_15 = arith.constant 0 : index
    %c0_16 = arith.constant 0 : index
    %37 = vector.load %arg2[%c0_14, %36, %c0_15, %c0_16] : memref<1x4x2x128xf32, #tpu.memory_space<vmem>>, vector<1x1x2x128xf32>
    %38 = vector.shape_cast %37 : vector<1x1x2x128xf32> to vector<2x128xf32>
    %c0_17 = arith.constant 0 : index
    %39 = arith.index_cast %c1_i32 : i32 to index
    %c0_18 = arith.constant 0 : index
    %c0_19 = arith.constant 0 : index
    %40 = vector.load %arg3[%c0_17, %39, %c0_18, %c0_19] : memref<1x4x2x128xf32, #tpu.memory_space<vmem>>, vector<1x1x2x128xf32>
    %41 = vector.shape_cast %40 : vector<1x1x2x128xf32> to vector<2x128xf32>
    %c0_20 = arith.constant 0 : index
    %42 = arith.index_cast %c1_i32 : i32 to index
    %c0_21 = arith.constant 0 : index
    %c0_22 = arith.constant 0 : index
    %43 = vector.load %arg4[%c0_20, %42, %c0_21, %c0_22] : memref<1x4x4x128xf32, #tpu.memory_space<vmem>>, vector<1x1x4x128xf32>
    %44 = vector.shape_cast %43 : vector<1x1x4x128xf32> to vector<4x128xf32>
    %45 = vector.shape_cast %44 : vector<4x128xf32> to vector<1x4x128xf32>
    %c0_23 = arith.constant 0 : index
    %46 = arith.index_cast %c1_i32 : i32 to index
    %c0_24 = arith.constant 0 : index
    %c0_25 = arith.constant 0 : index
    %47 = vector.load %arg5[%c0_23, %46, %c0_24, %c0_25] : memref<1x4x4x128xf32, #tpu.memory_space<vmem>>, vector<1x1x4x128xf32>
    %48 = vector.shape_cast %47 : vector<1x1x4x128xf32> to vector<4x128xf32>
    %49 = vector.shape_cast %48 : vector<4x128xf32> to vector<1x4x128xf32>
    %c0_26 = arith.constant 0 : index
    %50 = arith.index_cast %c1_i32 : i32 to index
    %c0_27 = arith.constant 0 : index
    %c0_28 = arith.constant 0 : index
    %51 = vector.load %arg6[%c0_26, %50, %c0_27, %c0_28] : memref<1x4x4x128xf32, #tpu.memory_space<vmem>>, vector<1x1x4x128xf32>
    %52 = vector.shape_cast %51 : vector<1x1x4x128xf32> to vector<4x128xf32>
    %53 = vector.shape_cast %52 : vector<4x128xf32> to vector<1x4x128xf32>
    %54 = arith.addf %38, %41 : vector<2x128xf32>
    %55 = vector.shape_cast %54 : vector<2x128xf32> to vector<2x1x128xf32>
    %56 = vector.broadcast %55 : vector<2x1x128xf32> to vector<2x4x128xf32>
    %57 = vector.broadcast %45 : vector<1x4x128xf32> to vector<2x4x128xf32>
    %58 = arith.mulf %56, %57 : vector<2x4x128xf32>
    %59 = vector.shape_cast %41 : vector<2x128xf32> to vector<2x1x128xf32>
    %60 = vector.broadcast %59 : vector<2x1x128xf32> to vector<2x4x128xf32>
    %61 = vector.broadcast %49 : vector<1x4x128xf32> to vector<2x4x128xf32>
    %62 = arith.mulf %60, %61 : vector<2x4x128xf32>
    %63 = arith.subf %58, %62 : vector<2x4x128xf32>
    %64 = arith.addf %29, %63 : vector<2x4x128xf32>
    %65 = vector.shape_cast %38 : vector<2x128xf32> to vector<2x1x128xf32>
    %66 = vector.broadcast %65 : vector<2x1x128xf32> to vector<2x4x128xf32>
    %67 = vector.broadcast %53 : vector<1x4x128xf32> to vector<2x4x128xf32>
    %68 = arith.mulf %66, %67 : vector<2x4x128xf32>
    %69 = arith.addf %58, %68 : vector<2x4x128xf32>
    %70 = arith.addf %35, %69 : vector<2x4x128xf32>
    %c2_i32 = arith.constant 2 : i32
    %c0_29 = arith.constant 0 : index
    %71 = arith.index_cast %c2_i32 : i32 to index
    %c0_30 = arith.constant 0 : index
    %c0_31 = arith.constant 0 : index
    %72 = vector.load %arg2[%c0_29, %71, %c0_30, %c0_31] : memref<1x4x2x128xf32, #tpu.memory_space<vmem>>, vector<1x1x2x128xf32>
    %73 = vector.shape_cast %72 : vector<1x1x2x128xf32> to vector<2x128xf32>
    %c0_32 = arith.constant 0 : index
    %74 = arith.index_cast %c2_i32 : i32 to index
    %c0_33 = arith.constant 0 : index
    %c0_34 = arith.constant 0 : index
    %75 = vector.load %arg3[%c0_32, %74, %c0_33, %c0_34] : memref<1x4x2x128xf32, #tpu.memory_space<vmem>>, vector<1x1x2x128xf32>
    %76 = vector.shape_cast %75 : vector<1x1x2x128xf32> to vector<2x128xf32>
    %c0_35 = arith.constant 0 : index
    %77 = arith.index_cast %c2_i32 : i32 to index
    %c0_36 = arith.constant 0 : index
    %c0_37 = arith.constant 0 : index
    %78 = vector.load %arg4[%c0_35, %77, %c0_36, %c0_37] : memref<1x4x4x128xf32, #tpu.memory_space<vmem>>, vector<1x1x4x128xf32>
    %79 = vector.shape_cast %78 : vector<1x1x4x128xf32> to vector<4x128xf32>
    %80 = vector.shape_cast %79 : vector<4x128xf32> to vector<1x4x128xf32>
    %c0_38 = arith.constant 0 : index
    %81 = arith.index_cast %c2_i32 : i32 to index
    %c0_39 = arith.constant 0 : index
    %c0_40 = arith.constant 0 : index
    %82 = vector.load %arg5[%c0_38, %81, %c0_39, %c0_40] : memref<1x4x4x128xf32, #tpu.memory_space<vmem>>, vector<1x1x4x128xf32>
    %83 = vector.shape_cast %82 : vector<1x1x4x128xf32> to vector<4x128xf32>
    %84 = vector.shape_cast %83 : vector<4x128xf32> to vector<1x4x128xf32>
    %c0_41 = arith.constant 0 : index
    %85 = arith.index_cast %c2_i32 : i32 to index
    %c0_42 = arith.constant 0 : index
    %c0_43 = arith.constant 0 : index
    %86 = vector.load %arg6[%c0_41, %85, %c0_42, %c0_43] : memref<1x4x4x128xf32, #tpu.memory_space<vmem>>, vector<1x1x4x128xf32>
    %87 = vector.shape_cast %86 : vector<1x1x4x128xf32> to vector<4x128xf32>
    %88 = vector.shape_cast %87 : vector<4x128xf32> to vector<1x4x128xf32>
    %89 = arith.addf %73, %76 : vector<2x128xf32>
    %90 = vector.shape_cast %89 : vector<2x128xf32> to vector<2x1x128xf32>
    %91 = vector.broadcast %90 : vector<2x1x128xf32> to vector<2x4x128xf32>
    %92 = vector.broadcast %80 : vector<1x4x128xf32> to vector<2x4x128xf32>
    %93 = arith.mulf %91, %92 : vector<2x4x128xf32>
    %94 = vector.shape_cast %76 : vector<2x128xf32> to vector<2x1x128xf32>
    %95 = vector.broadcast %94 : vector<2x1x128xf32> to vector<2x4x128xf32>
    %96 = vector.broadcast %84 : vector<1x4x128xf32> to vector<2x4x128xf32>
    %97 = arith.mulf %95, %96 : vector<2x4x128xf32>
    %98 = arith.subf %93, %97 : vector<2x4x128xf32>
    %99 = arith.addf %64, %98 : vector<2x4x128xf32>
    %100 = vector.shape_cast %73 : vector<2x128xf32> to vector<2x1x128xf32>
    %101 = vector.broadcast %100 : vector<2x1x128xf32> to vector<2x4x128xf32>
    %102 = vector.broadcast %88 : vector<1x4x128xf32> to vector<2x4x128xf32>
    %103 = arith.mulf %101, %102 : vector<2x4x128xf32>
    %104 = arith.addf %93, %103 : vector<2x4x128xf32>
    %105 = arith.addf %70, %104 : vector<2x4x128xf32>
    %c3_i32 = arith.constant 3 : i32
    %c0_44 = arith.constant 0 : index
    %106 = arith.index_cast %c3_i32 : i32 to index
    %c0_45 = arith.constant 0 : index
    %c0_46 = arith.constant 0 : index
    %107 = vector.load %arg2[%c0_44, %106, %c0_45, %c0_46] : memref<1x4x2x128xf32, #tpu.memory_space<vmem>>, vector<1x1x2x128xf32>
    %108 = vector.shape_cast %107 : vector<1x1x2x128xf32> to vector<2x128xf32>
    %c0_47 = arith.constant 0 : index
    %109 = arith.index_cast %c3_i32 : i32 to index
    %c0_48 = arith.constant 0 : index
    %c0_49 = arith.constant 0 : index
    %110 = vector.load %arg3[%c0_47, %109, %c0_48, %c0_49] : memref<1x4x2x128xf32, #tpu.memory_space<vmem>>, vector<1x1x2x128xf32>
    %111 = vector.shape_cast %110 : vector<1x1x2x128xf32> to vector<2x128xf32>
    %c0_50 = arith.constant 0 : index
    %112 = arith.index_cast %c3_i32 : i32 to index
    %c0_51 = arith.constant 0 : index
    %c0_52 = arith.constant 0 : index
    %113 = vector.load %arg4[%c0_50, %112, %c0_51, %c0_52] : memref<1x4x4x128xf32, #tpu.memory_space<vmem>>, vector<1x1x4x128xf32>
    %114 = vector.shape_cast %113 : vector<1x1x4x128xf32> to vector<4x128xf32>
    %115 = vector.shape_cast %114 : vector<4x128xf32> to vector<1x4x128xf32>
    %c0_53 = arith.constant 0 : index
    %116 = arith.index_cast %c3_i32 : i32 to index
    %c0_54 = arith.constant 0 : index
    %c0_55 = arith.constant 0 : index
    %117 = vector.load %arg5[%c0_53, %116, %c0_54, %c0_55] : memref<1x4x4x128xf32, #tpu.memory_space<vmem>>, vector<1x1x4x128xf32>
    %118 = vector.shape_cast %117 : vector<1x1x4x128xf32> to vector<4x128xf32>
    %119 = vector.shape_cast %118 : vector<4x128xf32> to vector<1x4x128xf32>
    %c0_56 = arith.constant 0 : index
    %120 = arith.index_cast %c3_i32 : i32 to index
    %c0_57 = arith.constant 0 : index
    %c0_58 = arith.constant 0 : index
    %121 = vector.load %arg6[%c0_56, %120, %c0_57, %c0_58] : memref<1x4x4x128xf32, #tpu.memory_space<vmem>>, vector<1x1x4x128xf32>
    %122 = vector.shape_cast %121 : vector<1x1x4x128xf32> to vector<4x128xf32>
    %123 = vector.shape_cast %122 : vector<4x128xf32> to vector<1x4x128xf32>
    %124 = arith.addf %108, %111 : vector<2x128xf32>
    %125 = vector.shape_cast %124 : vector<2x128xf32> to vector<2x1x128xf32>
    %126 = vector.broadcast %125 : vector<2x1x128xf32> to vector<2x4x128xf32>
    %127 = vector.broadcast %115 : vector<1x4x128xf32> to vector<2x4x128xf32>
    %128 = arith.mulf %126, %127 : vector<2x4x128xf32>
    %129 = vector.shape_cast %111 : vector<2x128xf32> to vector<2x1x128xf32>
    %130 = vector.broadcast %129 : vector<2x1x128xf32> to vector<2x4x128xf32>
    %131 = vector.broadcast %119 : vector<1x4x128xf32> to vector<2x4x128xf32>
    %132 = arith.mulf %130, %131 : vector<2x4x128xf32>
    %133 = arith.subf %128, %132 : vector<2x4x128xf32>
    %134 = arith.addf %99, %133 : vector<2x4x128xf32>
    %135 = vector.shape_cast %108 : vector<2x128xf32> to vector<2x1x128xf32>
    %136 = vector.broadcast %135 : vector<2x1x128xf32> to vector<2x4x128xf32>
    %137 = vector.broadcast %123 : vector<1x4x128xf32> to vector<2x4x128xf32>
    %138 = arith.mulf %136, %137 : vector<2x4x128xf32>
    %139 = arith.addf %128, %138 : vector<2x4x128xf32>
    %140 = arith.addf %105, %139 : vector<2x4x128xf32>
    %c4_i32 = arith.constant 4 : i32
    %c0_59 = arith.constant 0 : index
    %c0_60 = arith.constant 0 : index
    %c0_61 = arith.constant 0 : index
    %c0_62 = arith.constant 0 : index
    %141 = vector.load %arg7[%c0_59, %c0_60, %c0_61, %c0_62] : memref<1x2x4x128xf32, #tpu.memory_space<vmem>>, vector<1x2x4x128xf32>
    %142 = vector.shape_cast %141 : vector<1x2x4x128xf32> to vector<2x4x128xf32>
    %143 = vector.shape_cast %134 : vector<2x4x128xf32> to vector<1x2x4x128xf32>
    tpu.vector_store %arg7[%c0_59, %c0_60, %c0_61, %c0_62], %143 {strides = array<i32>} : memref<1x2x4x128xf32, #tpu.memory_space<vmem>>, vector<1x2x4x128xf32>,
    %c0_63 = arith.constant 0 : index
    %c0_64 = arith.constant 0 : index
    %c0_65 = arith.constant 0 : index
    %c0_66 = arith.constant 0 : index
    %144 = vector.load %arg8[%c0_63, %c0_64, %c0_65, %c0_66] : memref<1x2x4x128xf32, #tpu.memory_space<vmem>>, vector<1x2x4x128xf32>
    %145 = vector.shape_cast %144 : vector<1x2x4x128xf32> to vector<2x4x128xf32>
    %146 = vector.shape_cast %140 : vector<2x4x128xf32> to vector<1x2x4x128xf32>
    tpu.vector_store %arg8[%c0_63, %c0_64, %c0_65, %c0_66], %146 {strides = array<i32>} : memref<1x2x4x128xf32, #tpu.memory_space<vmem>>, vector<1x2x4x128xf32>,
    return
  }
  func.func @transform_0(%arg0: i32, %arg1: i32) -> (i32, i32, i32, i32) {
    %c0_i32 = arith.constant 0 : i32
    %c0_i32_0 = arith.constant 0 : i32
    %c0_i32_1 = arith.constant 0 : i32
    return %arg0, %c0_i32, %c0_i32_0, %arg1 : i32, i32, i32, i32
  }
  func.func @transform_1(%arg0: i32, %arg1: i32) -> (i32, i32, i32, i32) {
    %c0_i32 = arith.constant 0 : i32
    %c0_i32_0 = arith.constant 0 : i32
    %c0_i32_1 = arith.constant 0 : i32
    return %arg0, %c0_i32, %c0_i32_0, %arg1 : i32, i32, i32, i32
  }
  func.func @transform_2(%arg0: i32, %arg1: i32) -> (i32, i32, i32, i32) {
    %c0_i32 = arith.constant 0 : i32
    %c0_i32_0 = arith.constant 0 : i32
    %c0_i32_1 = arith.constant 0 : i32
    return %arg0, %c0_i32, %c0_i32_0, %arg1 : i32, i32, i32, i32
  }
  func.func @transform_3(%arg0: i32, %arg1: i32) -> (i32, i32, i32, i32) {
    %c0_i32 = arith.constant 0 : i32
    %c0_i32_0 = arith.constant 0 : i32
    %c0_i32_1 = arith.constant 0 : i32
    return %arg0, %c0_i32, %c0_i32_0, %arg1 : i32, i32, i32, i32
  }
  func.func @transform_4(%arg0: i32, %arg1: i32) -> (i32, i32, i32, i32) {
    %c0_i32 = arith.constant 0 : i32
    %c0_i32_0 = arith.constant 0 : i32
    %c0_i32_1 = arith.constant 0 : i32
    return %arg0, %c0_i32, %c0_i32_0, %arg1 : i32, i32, i32, i32
  }
  func.func @transform_5(%arg0: i32, %arg1: i32) -> (i32, i32, i32, i32) {
    %c0_i32 = arith.constant 0 : i32
    %c0_i32_0 = arith.constant 0 : i32
    %c0_i32_1 = arith.constant 0 : i32
    return %arg0, %c0_i32, %c0_i32_0, %arg1 : i32, i32, i32, i32
  }
  func.func @transform_6(%arg0: i32, %arg1: i32) -> (i32, i32, i32, i32) {
    %c0_i32 = arith.constant 0 : i32
    %c0_i32_0 = arith.constant 0 : i32
    %c0_i32_1 = arith.constant 0 : i32
    return %arg0, %c0_i32, %c0_i32_0, %arg1 : i32, i32, i32, i32
  }
}

</mosaic_0001>

<llo_original>
// kernel: tpu_custom_call.1
$region0: #{tpu_custom_call.1}
  #allocation0 [shape = 'u32[]', space=smem, size = 0x4, offset = 0x4, fixed_abs, tag = 'smem constant byte address 0x4 - core index']
  #allocation1 [shape = 'u32[144,128]{1,0:T(1,128)}', space=vmem, size = 0x12000, scoped, tag = 'internal scratch']
  %s0 = inlined_call_operand.hbm [shape: f32[4,4,2,128], index: 0, kind: input, shape index: {}]
  %s1 = inlined_call_operand.hbm [shape: f32[4,4,2,128], index: 1, kind: input, shape index: {}]
  %s2 = inlined_call_operand.hbm [shape: f32[4,4,4,128], index: 2, kind: input, shape index: {}]
  %s3 = inlined_call_operand.hbm [shape: f32[4,4,4,128], index: 3, kind: input, shape index: {}]
  %s4 = inlined_call_operand.hbm [shape: f32[4,4,4,128], index: 4, kind: input, shape index: {}]
  %s5 = inlined_call_operand.hbm [shape: f32[4,2,4,128], index: 5, kind: output, shape index: {0}]
  %s6 = inlined_call_operand.hbm [shape: f32[4,2,4,128], index: 6, kind: output, shape index: {1}]
  %7 = xla_tuple %s5, %s6
  %s8 = sld [smem:[#allocation0]]
  $region81: #{tpu_custom_call.1} parent=0
    _
  %s10 = ssub.s32 1, %s8
  %s11 = scalar_select 0, %s10, %s8
  $region1: #{tpu_custom_call.1} parent=0
    #allocation2 [shape = 'u8[8192]{0}', space=vmem, size = 0x2000, scoped, tag = 'input window, operand 0']
    #allocation3 [shape = 's32[2]{0}', space=sflag, size = 0x8, scoped, tag = 'scoped memory for tpu_custom_call.1']
    #allocation4 [shape = 's32[2]{0}', space=sflag, size = 0x8, scoped, tag = 'scoped memory for tpu_custom_call.1']
    #allocation5 [shape = 'u8[8192]{0}', space=vmem, size = 0x2000, scoped, tag = 'input window, operand 1']
    #allocation6 [shape = 's32[2]{0}', space=sflag, size = 0x8, scoped, tag = 'scoped memory for tpu_custom_call.1']
    #allocation7 [shape = 'u8[16384]{0}', space=vmem, size = 0x4000, scoped, tag = 'input window, operand 2']
    #allocation8 [shape = 'u8[16384]{0}', space=vmem, size = 0x4000, scoped, tag = 'input window, operand 3']
    #allocation9 [shape = 's32[2]{0}', space=sflag, size = 0x8, scoped, tag = 'scoped memory for tpu_custom_call.1']
    #allocation10 [shape = 'u8[16384]{0}', space=vmem, size = 0x4000, scoped, tag = 'input window, operand 4']
    #allocation11 [shape = 'u8[8192]{0}', space=vmem, size = 0x2000, scoped, tag = 'output window, operand 0']
    #allocation12 [shape = 'u8[8192]{0}', space=vmem, size = 0x2000, scoped, tag = 'output window, operand 1']
    #allocation13 [shape = 's32[2]{0}', space=sflag, size = 0x8, scoped, tag = 'scoped memory for tpu_custom_call.1']
    %12 = vsyncpa [#allocation3], 0
    %s13 = scalar_lea.sflag [#allocation3], 1
    %14 = vsyncpa %s13, 0
    %15 = vsyncpa [#allocation6], 0
    %s16 = scalar_lea.sflag [#allocation6], 1
    %17 = vsyncpa %s16, 0
    %18 = vsyncpa [#allocation9], 0
    %s19 = scalar_lea.sflag [#allocation9], 1
    %20 = vsyncpa %s19, 0
    %21 = vsyncpa [#allocation4], 0
    %s22 = scalar_lea.sflag [#allocation4], 1
    %23 = vsyncpa %s22, 0
    %24 = vsyncpa [#allocation13], 0
    %s25 = scalar_lea.sflag [#allocation13], 1
    %26 = vsyncpa %s25, 0
    loop: start=0, step=1, limit=6
    $region2: #{tpu_custom_call.1} parent=1 // loop_pre_header
      _
    $region3: #{tpu_custom_call.1} parent=1 // loop_header
      %s28 = sphi 0, %s32
      %p29 = scmp.ge.s32.totalorder %s28, 6
      %s35 = sphi 0, %s47
      %s36 = sphi 0, %s43
      %s37 = sphi 0, %s35
      %s38 = sphi 0, %s36
      %s39 = sphi 0, %s37
      %s40 = sphi 0, %s38
      %s52 = sphi 0, %s54
      %s55 = sphi 0, %s52
      %s56 = sphi 0, %s55
      %s72 = sphi 0, %s56
      %s80 = sphi 0, %s82
      %s83 = sphi 0, %s80
      %s84 = sphi 0, %s83
      %s100 = sphi 0, %s84
      %s108 = sphi 0, %s110
      %s111 = sphi 0, %s108
      %s112 = sphi 0, %s111
      %s128 = sphi 0, %s112
      %s136 = sphi 0, %s138
      %s139 = sphi 0, %s136
      %s140 = sphi 0, %s139
      %s156 = sphi 0, %s140
      %s164 = sphi 0, %s166
      %s167 = sphi 0, %s164
      %s168 = sphi 0, %s167
      %s184 = sphi 0, %s168
      %s192 = sphi 0, %s194
      %s195 = sphi 0, %s192
      %s196 = sphi 0, %s195
      %s212 = sphi 0, %s196
      %s220 = sphi 0, %s222
      %s223 = sphi 0, %s220
      %s224 = sphi 0, %s223
      %s240 = sphi 0, %s224
    $region4: #{tpu_custom_call.1} parent=1 // loop_header_branch
      %31 = sbr.rel (%p29) target = $region8
    $region5: #{tpu_custom_call.1} parent=1 // loop_body
      %s33 = ssub.s32 %s28, 1
      %s34 = ssub.s32 %s28, 2
      %s41 = sadd.s32 1, %s36
      %p42 = scmp.ge.s32.totalorder %s41, 1
      %s43 = scalar_select %p42, 0, %s41
      %s44 = sadd.s32 1, %s35
      %s45 = scalar_select %p42, %s44, %s35
      %p46 = scmp.ge.s32.totalorder %s45, 4
      %s47 = scalar_select %p46, 0, %s45
      %s48 = ssub.s32 %s35, %s47
      %s49 = ssub.s32 %s36, %s43
      %s50 = sor.u32 %s48, %s49
      %p51 = scmp.eq.s32.totalorder %s50, 0
      %s53 = sadd.s32 %s52, 1
      %s54 = scalar_select %p51, %s52, %s53
      %p57 = pneg %p51
      %p58 = scmp.eq.s32.totalorder %s28, 3
      %p59 = por %p57, %p58
      %p60 = scmp.ne.s32.totalorder %s52, %s55
      %p61 = scmp.eq.s32.totalorder %s28, 0
      %p62 = por %p60, %p61
      %p63 = scmp.ne.s32.totalorder %s52, %s55
      %p64 = scmp.eq.s32.totalorder %s33, 3
      %p65 = por %p63, %p64
      %p66 = scmp.ne.s32.totalorder %s55, %s56
      %p67 = scmp.eq.s32.totalorder %s33, 0
      %p68 = por %p66, %p67
      %p69 = scmp.ne.s32.totalorder %s55, %s56
      %p70 = scmp.eq.s32.totalorder %s34, 3
      %p71 = por %p69, %p70
      %p73 = scmp.ne.s32.totalorder %s56, %s72
      %p74 = scmp.eq.s32.totalorder %s34, 0
      %p75 = por %p73, %p74
      %s76 = ssub.s32 %s35, %s47
      %s77 = ssub.s32 %s36, %s43
      %s78 = sor.u32 %s76, %s77
      %p79 = scmp.eq.s32.totalorder %s78, 0
      %s81 = sadd.s32 %s80, 1
      %s82 = scalar_select %p79, %s80, %s81
      %p85 = pneg %p79
      %p86 = scmp.eq.s32.totalorder %s28, 3
      %p87 = por %p85, %p86
      %p88 = scmp.ne.s32.totalorder %s80, %s83
      %p89 = scmp.eq.s32.totalorder %s28, 0
      %p90 = por %p88, %p89
      %p91 = scmp.ne.s32.totalorder %s80, %s83
      %p92 = scmp.eq.s32.totalorder %s33, 3
      %p93 = por %p91, %p92
      %p94 = scmp.ne.s32.totalorder %s83, %s84
      %p95 = scmp.eq.s32.totalorder %s33, 0
      %p96 = por %p94, %p95
      %p97 = scmp.ne.s32.totalorder %s83, %s84
      %p98 = scmp.eq.s32.totalorder %s34, 3
      %p99 = por %p97, %p98
      %p101 = scmp.ne.s32.totalorder %s84, %s100
      %p102 = scmp.eq.s32.totalorder %s34, 0
      %p103 = por %p101, %p102
      %s104 = ssub.s32 %s35, %s47
      %s105 = ssub.s32 %s36, %s43
      %s106 = sor.u32 %s104, %s105
      %p107 = scmp.eq.s32.totalorder %s106, 0
      %s109 = sadd.s32 %s108, 1
      %s110 = scalar_select %p107, %s108, %s109
      %p113 = pneg %p107
      %p114 = scmp.eq.s32.totalorder %s28, 3
      %p115 = por %p113, %p114
      %p116 = scmp.ne.s32.totalorder %s108, %s111
      %p117 = scmp.eq.s32.totalorder %s28, 0
      %p118 = por %p116, %p117
      %p119 = scmp.ne.s32.totalorder %s108, %s111
      %p120 = scmp.eq.s32.totalorder %s33, 3
      %p121 = por %p119, %p120
      %p122 = scmp.ne.s32.totalorder %s111, %s112
      %p123 = scmp.eq.s32.totalorder %s33, 0
      %p124 = por %p122, %p123
      %p125 = scmp.ne.s32.totalorder %s111, %s112
      %p126 = scmp.eq.s32.totalorder %s34, 3
      %p127 = por %p125, %p126
      %p129 = scmp.ne.s32.totalorder %s112, %s128
      %p130 = scmp.eq.s32.totalorder %s34, 0
      %p131 = por %p129, %p130
      %s132 = ssub.s32 %s35, %s47
      %s133 = ssub.s32 %s36, %s43
      %s134 = sor.u32 %s132, %s133
      %p135 = scmp.eq.s32.totalorder %s134, 0
      %s137 = sadd.s32 %s136, 1
      %s138 = scalar_select %p135, %s136, %s137
      %p141 = pneg %p135
      %p142 = scmp.eq.s32.totalorder %s28, 3
      %p143 = por %p141, %p142
      %p144 = scmp.ne.s32.totalorder %s136, %s139
      %p145 = scmp.eq.s32.totalorder %s28, 0
      %p146 = por %p144, %p145
      %p147 = scmp.ne.s32.totalorder %s136, %s139
      %p148 = scmp.eq.s32.totalorder %s33, 3
      %p149 = por %p147, %p148
      %p150 = scmp.ne.s32.totalorder %s139, %s140
      %p151 = scmp.eq.s32.totalorder %s33, 0
      %p152 = por %p150, %p151
      %p153 = scmp.ne.s32.totalorder %s139, %s140
      %p154 = scmp.eq.s32.totalorder %s34, 3
      %p155 = por %p153, %p154
      %p157 = scmp.ne.s32.totalorder %s140, %s156
      %p158 = scmp.eq.s32.totalorder %s34, 0
      %p159 = por %p157, %p158
      %s160 = ssub.s32 %s35, %s47
      %s161 = ssub.s32 %s36, %s43
      %s162 = sor.u32 %s160, %s161
      %p163 = scmp.eq.s32.totalorder %s162, 0
      %s165 = sadd.s32 %s164, 1
      %s166 = scalar_select %p163, %s164, %s165
      %p169 = pneg %p163
      %p170 = scmp.eq.s32.totalorder %s28, 3
      %p171 = por %p169, %p170
      %p172 = scmp.ne.s32.totalorder %s164, %s167
      %p173 = scmp.eq.s32.totalorder %s28, 0
      %p174 = por %p172, %p173
      %p175 = scmp.ne.s32.totalorder %s164, %s167
      %p176 = scmp.eq.s32.totalorder %s33, 3
      %p177 = por %p175, %p176
      %p178 = scmp.ne.s32.totalorder %s167, %s168
      %p179 = scmp.eq.s32.totalorder %s33, 0
      %p180 = por %p178, %p179
      %p181 = scmp.ne.s32.totalorder %s167, %s168
      %p182 = scmp.eq.s32.totalorder %s34, 3
      %p183 = por %p181, %p182
      %p185 = scmp.ne.s32.totalorder %s168, %s184
      %p186 = scmp.eq.s32.totalorder %s34, 0
      %p187 = por %p185, %p186
      %s188 = ssub.s32 %s35, %s47
      %s189 = ssub.s32 %s36, %s43
      %s190 = sor.u32 %s188, %s189
      %p191 = scmp.eq.s32.totalorder %s190, 0
      %s193 = sadd.s32 %s192, 1
      %s194 = scalar_select %p191, %s192, %s193
      %p197 = pneg %p191
      %p198 = scmp.eq.s32.totalorder %s28, 3
      %p199 = por %p197, %p198
      %p200 = scmp.ne.s32.totalorder %s192, %s195
      %p201 = scmp.eq.s32.totalorder %s28, 0
      %p202 = por %p200, %p201
      %p203 = scmp.ne.s32.totalorder %s192, %s195
      %p204 = scmp.eq.s32.totalorder %s33, 3
      %p205 = por %p203, %p204
      %p206 = scmp.ne.s32.totalorder %s195, %s196
      %p207 = scmp.eq.s32.totalorder %s33, 0
      %p208 = por %p206, %p207
      %p209 = scmp.ne.s32.totalorder %s195, %s196
      %p210 = scmp.eq.s32.totalorder %s34, 3
      %p211 = por %p209, %p210
      %p213 = scmp.ne.s32.totalorder %s196, %s212
      %p214 = scmp.eq.s32.totalorder %s34, 0
      %p215 = por %p213, %p214
      %s216 = ssub.s32 %s35, %s47
      %s217 = ssub.s32 %s36, %s43
      %s218 = sor.u32 %s216, %s217
      %p219 = scmp.eq.s32.totalorder %s218, 0
      %s221 = sadd.s32 %s220, 1
      %s222 = scalar_select %p219, %s220, %s221
      %p225 = pneg %p219
      %p226 = scmp.eq.s32.totalorder %s28, 3
      %p227 = por %p225, %p226
      %p228 = scmp.ne.s32.totalorder %s220, %s223
      %p229 = scmp.eq.s32.totalorder %s28, 0
      %p230 = por %p228, %p229
      %p231 = scmp.ne.s32.totalorder %s220, %s223
      %p232 = scmp.eq.s32.totalorder %s33, 3
      %p233 = por %p231, %p232
      %p234 = scmp.ne.s32.totalorder %s223, %s224
      %p235 = scmp.eq.s32.totalorder %s33, 0
      %p236 = por %p234, %p235
      %p237 = scmp.ne.s32.totalorder %s223, %s224
      %p238 = scmp.eq.s32.totalorder %s34, 3
      %p239 = por %p237, %p238
      %p241 = scmp.ne.s32.totalorder %s224, %s240
      %p242 = scmp.eq.s32.totalorder %s34, 0
      %p243 = por %p241, %p242
      %p244 = scmp.le.s32.totalorder 1, %s28
      %p245 = scmp.lt.s32.totalorder %s28, 5
      %p246 = pnand %p244, %p245
      %p247 = pneg %p246
      // Predicated region
      $region9: #{tpu_custom_call.1} parent=5 // pred_check
        _
      $region10: #{tpu_custom_call.1} parent=5 // pred_check_branch
        %249 = sbr.rel (%p246) target = $region12
      $region11: #{tpu_custom_call.1} parent=5 // pred_region
        %s250 = ssub.s32 %s28, 1
      $region12: #{tpu_custom_call.1} parent=5 // pred_fallthru
        _
      %p251 = scmp.lt.s32.totalorder %s28, 4
      // Predicated region
      $region13: #{tpu_custom_call.1} parent=5 // pred_check
        %p252 = pneg %p251
      $region14: #{tpu_custom_call.1} parent=5 // pred_check_branch
        %254 = sbr.rel (%p252) target = $region16
      $region15: #{tpu_custom_call.1} parent=5 // pred_region
        // Predicated region
        $region17: #{tpu_custom_call.1} parent=15 // pred_check
          %p255 = pneg %p62
        $region18: #{tpu_custom_call.1} parent=15 // pred_check_branch
          %257 = sbr.rel (%p255) target = $region20
        $region19: #{tpu_custom_call.1} parent=15 // pred_region
          %s258 = sand.u32 %s52, 1
          %s259 = scalar_lea.sflag [#allocation3], %s258
          %s260 = sand.u32 %s52, 1
          %s261 = smul.addr %s260, 8
          %s262 = scalar_lea.vmem [#allocation2], %s261
          %s264 = ssub.s32 128, 128
          %265 = vsyncadd %s259, %s264
          %s266 = smul.addr %s35, 4
          %s267 = sadd.s32 %s36, %s266
          %s268 = smul.addr %s267, 32
          %s269 = scalar_lea.hbm %s0, %s268
          %s270 = sshll.u32 %s262, 4
          %s271 = int_to_ptr.vmem [resolvable:$true] %s270
          %276 = dma.hbm_to_vmem [thread:$0]  %s269, 128, %s271, %s259, 32, 32, 2
        $region20: #{tpu_custom_call.1} parent=15 // pred_fallthru
          _
        // Predicated region
        $region21: #{tpu_custom_call.1} parent=15 // pred_check
          %p277 = pneg %p90
        $region22: #{tpu_custom_call.1} parent=15 // pred_check_branch
          %279 = sbr.rel (%p277) target = $region24
        $region23: #{tpu_custom_call.1} parent=15 // pred_region
          %s280 = sand.u32 %s28, 1
          %s281 = scalar_lea.sflag [#allocation6], %s280
          %s282 = sand.u32 %s80, 1
          %s283 = smul.addr %s282, 8
          %s284 = scalar_lea.vmem [#allocation5], %s283
          %s286 = ssub.s32 128, 128
          %287 = vsyncadd %s281, %s286
          %s288 = smul.addr %s35, 4
          %s289 = sadd.s32 %s36, %s288
          %s290 = smul.addr %s289, 32
          %s291 = scalar_lea.hbm %s1, %s290
          %s292 = sshll.u32 %s284, 4
          %s293 = int_to_ptr.vmem [resolvable:$true] %s292
          %298 = dma.hbm_to_vmem [thread:$0]  %s291, 128, %s293, %s281, 32, 32, 2
        $region24: #{tpu_custom_call.1} parent=15 // pred_fallthru
          _
        // Predicated region
        $region25: #{tpu_custom_call.1} parent=15 // pred_check
          %p299 = pneg %p118
        $region26: #{tpu_custom_call.1} parent=15 // pred_check_branch
          %301 = sbr.rel (%p299) target = $region28
        $region27: #{tpu_custom_call.1} parent=15 // pred_region
          %s302 = sand.u32 %s28, 1
          %s303 = scalar_lea.sflag [#allocation6], %s302
          %s304 = sand.u32 %s108, 1
          %s305 = smul.addr %s304, 16
          %s306 = scalar_lea.vmem [#allocation7], %s305
          %s308 = ssub.s32 256, 256
          %309 = vsyncadd %s303, %s308
          %s310 = smul.addr %s35, 4
          %s311 = sadd.s32 %s36, %s310
          %s312 = smul.addr %s311, 64
          %s313 = scalar_lea.hbm %s2, %s312
          %s314 = sshll.u32 %s306, 4
          %s315 = int_to_ptr.vmem [resolvable:$true] %s314
          %320 = dma.hbm_to_vmem [thread:$0]  %s313, 256, %s315, %s303, 64, 64, 4
        $region28: #{tpu_custom_call.1} parent=15 // pred_fallthru
          _
        // Predicated region
        $region29: #{tpu_custom_call.1} parent=15 // pred_check
          %p321 = pneg %p146
        $region30: #{tpu_custom_call.1} parent=15 // pred_check_branch
          %323 = sbr.rel (%p321) target = $region32
        $region31: #{tpu_custom_call.1} parent=15 // pred_region
          %s324 = sand.u32 %s28, 1
          %s325 = scalar_lea.sflag [#allocation9], %s324
          %s326 = sand.u32 %s136, 1
          %s327 = smul.addr %s326, 16
          %s328 = scalar_lea.vmem [#allocation8], %s327
          %s330 = ssub.s32 256, 256
          %331 = vsyncadd %s325, %s330
          %s332 = smul.addr %s35, 4
          %s333 = sadd.s32 %s36, %s332
          %s334 = smul.addr %s333, 64
          %s335 = scalar_lea.hbm %s3, %s334
          %s336 = sshll.u32 %s328, 4
          %s337 = int_to_ptr.vmem [resolvable:$true] %s336
          %342 = dma.hbm_to_vmem [thread:$0]  %s335, 256, %s337, %s325, 64, 64, 4
        $region32: #{tpu_custom_call.1} parent=15 // pred_fallthru
          _
        // Predicated region
        $region33: #{tpu_custom_call.1} parent=15 // pred_check
          %p343 = pneg %p174
        $region34: #{tpu_custom_call.1} parent=15 // pred_check_branch
          %345 = sbr.rel (%p343) target = $region36
        $region35: #{tpu_custom_call.1} parent=15 // pred_region
          %s346 = sand.u32 %s28, 1
          %s347 = scalar_lea.sflag [#allocation9], %s346
          %s348 = sand.u32 %s164, 1
          %s349 = smul.addr %s348, 16
          %s350 = scalar_lea.vmem [#allocation10], %s349
          %s352 = ssub.s32 256, 256
          %353 = vsyncadd %s347, %s352
          %s354 = smul.addr %s35, 4
          %s355 = sadd.s32 %s36, %s354
          %s356 = smul.addr %s355, 64
          %s357 = scalar_lea.hbm %s4, %s356
          %s358 = sshll.u32 %s350, 4
          %s359 = int_to_ptr.vmem [resolvable:$true] %s358
          %364 = dma.hbm_to_vmem [thread:$0]  %s357, 256, %s359, %s347, 64, 64, 4
        $region36: #{tpu_custom_call.1} parent=15 // pred_fallthru
          _
      $region16: #{tpu_custom_call.1} parent=5 // pred_fallthru
        _
      %p365 = scmp.le.s32.totalorder 1, %s28
      %p366 = scmp.lt.s32.totalorder %s28, 5
      %p367 = pnand %p365, %p366
      %p368 = pneg %p367
      // Predicated region
      $region37: #{tpu_custom_call.1} parent=5 // pred_check
        _
      $region38: #{tpu_custom_call.1} parent=5 // pred_check_branch
        %370 = sbr.rel (%p367) target = $region40
      $region39: #{tpu_custom_call.1} parent=5 // pred_region
        %s371 = ssub.s32 %s28, 1
        %s372 = sand.u32 %s55, 1
        %s373 = scalar_lea.sflag [#allocation3], %s372
        %s374 = sand.u32 %s55, 1
        %s375 = smul.addr %s374, 8
        %s376 = scalar_lea.vmem [#allocation2], %s375
        // Predicated region
        $region41: #{tpu_custom_call.1} parent=39 // pred_check
          %p377 = pneg %p68
        $region42: #{tpu_custom_call.1} parent=39 // pred_check_branch
          %379 = sbr.rel (%p377) target = $region44
        $region43: #{tpu_custom_call.1} parent=39 // pred_region
          %380 = dma.done %s373, 128
        $region44: #{tpu_custom_call.1} parent=39 // pred_fallthru
          _
        %s381 = sand.u32 %s33, 1
        %s382 = scalar_lea.sflag [#allocation6], %s381
        %s383 = sand.u32 %s83, 1
        %s384 = smul.addr %s383, 8
        %s385 = scalar_lea.vmem [#allocation5], %s384
        // Predicated region
        $region45: #{tpu_custom_call.1} parent=39 // pred_check
          %p386 = pneg %p96
        $region46: #{tpu_custom_call.1} parent=39 // pred_check_branch
          %388 = sbr.rel (%p386) target = $region48
        $region47: #{tpu_custom_call.1} parent=39 // pred_region
          %389 = dma.done %s382, 128
        $region48: #{tpu_custom_call.1} parent=39 // pred_fallthru
          _
        %s390 = sand.u32 %s33, 1
        %s391 = scalar_lea.sflag [#allocation6], %s390
        %s392 = sand.u32 %s111, 1
        %s393 = smul.addr %s392, 16
        %s394 = scalar_lea.vmem [#allocation7], %s393
        // Predicated region
        $region49: #{tpu_custom_call.1} parent=39 // pred_check
          %p395 = pneg %p124
        $region50: #{tpu_custom_call.1} parent=39 // pred_check_branch
          %397 = sbr.rel (%p395) target = $region52
        $region51: #{tpu_custom_call.1} parent=39 // pred_region
          %398 = dma.done %s391, 256
        $region52: #{tpu_custom_call.1} parent=39 // pred_fallthru
          _
        %s399 = sand.u32 %s33, 1
        %s400 = scalar_lea.sflag [#allocation9], %s399
        %s401 = sand.u32 %s139, 1
        %s402 = smul.addr %s401, 16
        %s403 = scalar_lea.vmem [#allocation8], %s402
        // Predicated region
        $region53: #{tpu_custom_call.1} parent=39 // pred_check
          %p404 = pneg %p152
        $region54: #{tpu_custom_call.1} parent=39 // pred_check_branch
          %406 = sbr.rel (%p404) target = $region56
        $region55: #{tpu_custom_call.1} parent=39 // pred_region
          %407 = dma.done %s400, 256
        $region56: #{tpu_custom_call.1} parent=39 // pred_fallthru
          _
        %s408 = sand.u32 %s33, 1
        %s409 = scalar_lea.sflag [#allocation9], %s408
        %s410 = sand.u32 %s167, 1
        %s411 = smul.addr %s410, 16
        %s412 = scalar_lea.vmem [#allocation10], %s411
        // Predicated region
        $region57: #{tpu_custom_call.1} parent=39 // pred_check
          %p413 = pneg %p180
        $region58: #{tpu_custom_call.1} parent=39 // pred_check_branch
          %415 = sbr.rel (%p413) target = $region60
        $region59: #{tpu_custom_call.1} parent=39 // pred_region
          %416 = dma.done %s409, 256
        $region60: #{tpu_custom_call.1} parent=39 // pred_fallthru
          _
        %s417 = sand.u32 %s55, 1
        %s418 = scalar_lea.sflag [#allocation3], %s417
        %s419 = sand.u32 %s55, 1
        %s420 = smul.addr %s419, 8
        %s421 = scalar_lea.vmem [#allocation2], %s420
        %p422 = pneg %p68
        %p423 = pneg %p65
        %s424 = sand.u32 %s33, 1
        %s425 = scalar_lea.sflag [#allocation6], %s424
        %s426 = sand.u32 %s83, 1
        %s427 = smul.addr %s426, 8
        %s428 = scalar_lea.vmem [#allocation5], %s427
        %p429 = pneg %p96
        %p430 = pneg %p93
        %s431 = sand.u32 %s33, 1
        %s432 = scalar_lea.sflag [#allocation6], %s431
        %s433 = sand.u32 %s111, 1
        %s434 = smul.addr %s433, 16
        %s435 = scalar_lea.vmem [#allocation7], %s434
        %p436 = pneg %p124
        %p437 = pneg %p121
        %s438 = sand.u32 %s33, 1
        %s439 = scalar_lea.sflag [#allocation9], %s438
        %s440 = sand.u32 %s139, 1
        %s441 = smul.addr %s440, 16
        %s442 = scalar_lea.vmem [#allocation8], %s441
        %p443 = pneg %p152
        %p444 = pneg %p149
        %s445 = sand.u32 %s33, 1
        %s446 = scalar_lea.sflag [#allocation9], %s445
        %s447 = sand.u32 %s167, 1
        %s448 = smul.addr %s447, 16
        %s449 = scalar_lea.vmem [#allocation10], %s448
        %p450 = pneg %p180
        %p451 = pneg %p177
        %p452 = pneg %p208
        %p453 = pneg %p205
        %s454 = sand.u32 %s195, 1
        %s455 = scalar_lea.sflag [#allocation4], %s454
        %s456 = sand.u32 %s195, 1
        %s457 = smul.addr %s456, 8
        %s458 = scalar_lea.vmem [#allocation11], %s457
        %p459 = pneg %p236
        %p460 = pneg %p233
        %s461 = sand.u32 %s223, 1
        %s462 = scalar_lea.sflag [#allocation13], %s461
        %s463 = sand.u32 %s223, 1
        %s464 = smul.addr %s463, 8
        %s465 = scalar_lea.vmem [#allocation12], %s464
        %v466 = vld [vmem:[%s376] sm:$0x3]
        %v467 = vld [vmem:[%s385] sm:$0x3]
        %v468 = vld [vmem:[%s394] sm:$0xf]
        %v469 = vld [vmem:[%s403] sm:$0xf]
        %v470 = vld [vmem:[%s412] sm:$0xf]
        %v471 = vadd.f32 %v466, %v467
        %v474 = vunpack.c.l.s4 1966171168
        %v475 = vunpack.c.0.s8 %v474
        %v476 = vlaneseq
        %v477 = vshrl.u32 %v476, 7
        %v478 = vsub.s32 %v475, %v477
        %v479 = vrot.slane %v471, %v478
        %v480 = vcombine.high %v479, %v479
        %v482 = vunpack.c.l.s4 1966171168
        %v483 = vunpack.c.0.s8 %v482
        %v484 = vlaneseq
        %v485 = vshrl.u32 %v484, 7
        %v486 = vsub.s32 %v483, %v485
        %v487 = vrot.slane %v479, %v486
        %v489 = vunpack.c.l.s4 1966171168
        %v490 = vunpack.c.0.s8 %v489
        %v491 = vlaneseq
        %v492 = vshrl.u32 %v491, 7
        %v493 = vsub.s32 %v490, %v492
        %v494 = vrot.slane %v480, %v493
        %v495 = vlaneseq
        %v496 = vshrl.u32 %v495, 7
        %v497 = vsub.s32 0, %v496
        %v498 = vrot.slane %v487, %v497
        %v499 = vlaneseq
        %v500 = vshrl.u32 %v499, 7
        %v501 = vsub.s32 0, %v500
        %v502 = vrot.slane %v494, %v501
        %v505 = vmul.f32 %v498, %v468
        %v506 = vmul.f32 %v502, %v468
        %v509 = vunpack.c.l.s4 1966171168
        %v510 = vunpack.c.0.s8 %v509
        %v511 = vlaneseq
        %v512 = vshrl.u32 %v511, 7
        %v513 = vsub.s32 %v510, %v512
        %v514 = vrot.slane %v467, %v513
        %v515 = vcombine.high %v514, %v514
        %v517 = vunpack.c.l.s4 1966171168
        %v518 = vunpack.c.0.s8 %v517
        %v519 = vlaneseq
        %v520 = vshrl.u32 %v519, 7
        %v521 = vsub.s32 %v518, %v520
        %v522 = vrot.slane %v514, %v521
        %v524 = vunpack.c.l.s4 1966171168
        %v525 = vunpack.c.0.s8 %v524
        %v526 = vlaneseq
        %v527 = vshrl.u32 %v526, 7
        %v528 = vsub.s32 %v525, %v527
        %v529 = vrot.slane %v515, %v528
        %v530 = vlaneseq
        %v531 = vshrl.u32 %v530, 7
        %v532 = vsub.s32 0, %v531
        %v533 = vrot.slane %v522, %v532
        %v534 = vlaneseq
        %v535 = vshrl.u32 %v534, 7
        %v536 = vsub.s32 0, %v535
        %v537 = vrot.slane %v529, %v536
        %v540 = vmul.f32 %v533, %v469
        %v541 = vmul.f32 %v537, %v469
        %v542 = vsub.f32 %v505, %v540
        %v543 = vsub.f32 %v506, %v541
        %v544 = vadd.f32 %v542, 0.0
        %v545 = vadd.f32 %v543, 0.0
        %v548 = vunpack.c.l.s4 1966171168
        %v549 = vunpack.c.0.s8 %v548
        %v550 = vlaneseq
        %v551 = vshrl.u32 %v550, 7
        %v552 = vsub.s32 %v549, %v551
        %v553 = vrot.slane %v466, %v552
        %v554 = vcombine.high %v553, %v553
        %v556 = vunpack.c.l.s4 1966171168
        %v557 = vunpack.c.0.s8 %v556
        %v558 = vlaneseq
        %v559 = vshrl.u32 %v558, 7
        %v560 = vsub.s32 %v557, %v559
        %v561 = vrot.slane %v553, %v560
        %v563 = vunpack.c.l.s4 1966171168
        %v564 = vunpack.c.0.s8 %v563
        %v565 = vlaneseq
        %v566 = vshrl.u32 %v565, 7
        %v567 = vsub.s32 %v564, %v566
        %v568 = vrot.slane %v554, %v567
        %v569 = vlaneseq
        %v570 = vshrl.u32 %v569, 7
        %v571 = vsub.s32 0, %v570
        %v572 = vrot.slane %v561, %v571
        %v573 = vlaneseq
        %v574 = vshrl.u32 %v573, 7
        %v575 = vsub.s32 0, %v574
        %v576 = vrot.slane %v568, %v575
        %v579 = vmul.f32 %v572, %v470
        %v580 = vmul.f32 %v576, %v470
        %v581 = vadd.f32 %v505, %v579
        %v582 = vadd.f32 %v506, %v580
        %v583 = vadd.f32 %v581, 0.0
        %v584 = vadd.f32 %v582, 0.0
        %s585 = scalar_lea.vmem %s376, 2 [#allocation2]
        %v586 = vld [vmem:[%s585] sm:$0x3]
        %s587 = scalar_lea.vmem %s385, 2 [#allocation5]
        %v588 = vld [vmem:[%s587] sm:$0x3]
        %s589 = scalar_lea.vmem %s394, 4 [#allocation7]
        %v590 = vld [vmem:[%s589] sm:$0xf]
        %s591 = scalar_lea.vmem %s403, 4 [#allocation8]
        %v592 = vld [vmem:[%s591] sm:$0xf]
        %s593 = scalar_lea.vmem %s412, 4 [#allocation10]
        %v594 = vld [vmem:[%s593] sm:$0xf]
        %v595 = vadd.f32 %v586, %v588
        %v598 = vunpack.c.l.s4 1966171168
        %v599 = vunpack.c.0.s8 %v598
        %v600 = vlaneseq
        %v601 = vshrl.u32 %v600, 7
        %v602 = vsub.s32 %v599, %v601
        %v603 = vrot.slane %v595, %v602
        %v604 = vcombine.high %v603, %v603
        %v606 = vunpack.c.l.s4 1966171168
        %v607 = vunpack.c.0.s8 %v606
        %v608 = vlaneseq
        %v609 = vshrl.u32 %v608, 7
        %v610 = vsub.s32 %v607, %v609
        %v611 = vrot.slane %v603, %v610
        %v613 = vunpack.c.l.s4 1966171168
        %v614 = vunpack.c.0.s8 %v613
        %v615 = vlaneseq
        %v616 = vshrl.u32 %v615, 7
        %v617 = vsub.s32 %v614, %v616
        %v618 = vrot.slane %v604, %v617
        %v619 = vlaneseq
        %v620 = vshrl.u32 %v619, 7
        %v621 = vsub.s32 0, %v620
        %v622 = vrot.slane %v611, %v621
        %v623 = vlaneseq
        %v624 = vshrl.u32 %v623, 7
        %v625 = vsub.s32 0, %v624
        %v626 = vrot.slane %v618, %v625
        %v629 = vmul.f32 %v622, %v590
        %v630 = vmul.f32 %v626, %v590
        %v633 = vunpack.c.l.s4 1966171168
        %v634 = vunpack.c.0.s8 %v633
        %v635 = vlaneseq
        %v636 = vshrl.u32 %v635, 7
        %v637 = vsub.s32 %v634, %v636
        %v638 = vrot.slane %v588, %v637
        %v639 = vcombine.high %v638, %v638
        %v641 = vunpack.c.l.s4 1966171168
        %v642 = vunpack.c.0.s8 %v641
        %v643 = vlaneseq
        %v644 = vshrl.u32 %v643, 7
        %v645 = vsub.s32 %v642, %v644
        %v646 = vrot.slane %v638, %v645
        %v648 = vunpack.c.l.s4 1966171168
        %v649 = vunpack.c.0.s8 %v648
        %v650 = vlaneseq
        %v651 = vshrl.u32 %v650, 7
        %v652 = vsub.s32 %v649, %v651
        %v653 = vrot.slane %v639, %v652
        %v654 = vlaneseq
        %v655 = vshrl.u32 %v654, 7
        %v656 = vsub.s32 0, %v655
        %v657 = vrot.slane %v646, %v656
        %v658 = vlaneseq
        %v659 = vshrl.u32 %v658, 7
        %v660 = vsub.s32 0, %v659
        %v661 = vrot.slane %v653, %v660
        %v664 = vmul.f32 %v657, %v592
        %v665 = vmul.f32 %v661, %v592
        %v666 = vsub.f32 %v629, %v664
        %v667 = vsub.f32 %v630, %v665
        %v668 = vadd.f32 %v544, %v666
        %v669 = vadd.f32 %v545, %v667
        %v672 = vunpack.c.l.s4 1966171168
        %v673 = vunpack.c.0.s8 %v672
        %v674 = vlaneseq
        %v675 = vshrl.u32 %v674, 7
        %v676 = vsub.s32 %v673, %v675
        %v677 = vrot.slane %v586, %v676
        %v678 = vcombine.high %v677, %v677
        %v680 = vunpack.c.l.s4 1966171168
        %v681 = vunpack.c.0.s8 %v680
        %v682 = vlaneseq
        %v683 = vshrl.u32 %v682, 7
        %v684 = vsub.s32 %v681, %v683
        %v685 = vrot.slane %v677, %v684
        %v687 = vunpack.c.l.s4 1966171168
        %v688 = vunpack.c.0.s8 %v687
        %v689 = vlaneseq
        %v690 = vshrl.u32 %v689, 7
        %v691 = vsub.s32 %v688, %v690
        %v692 = vrot.slane %v678, %v691
        %v693 = vlaneseq
        %v694 = vshrl.u32 %v693, 7
        %v695 = vsub.s32 0, %v694
        %v696 = vrot.slane %v685, %v695
        %v697 = vlaneseq
        %v698 = vshrl.u32 %v697, 7
        %v699 = vsub.s32 0, %v698
        %v700 = vrot.slane %v692, %v699
        %v703 = vmul.f32 %v696, %v594
        %v704 = vmul.f32 %v700, %v594
        %v705 = vadd.f32 %v629, %v703
        %v706 = vadd.f32 %v630, %v704
        %v707 = vadd.f32 %v583, %v705
        %v708 = vadd.f32 %v584, %v706
        %s709 = scalar_lea.vmem %s376, 4 [#allocation2]
        %v710 = vld [vmem:[%s709] sm:$0x3]
        %s711 = scalar_lea.vmem %s385, 4 [#allocation5]
        %v712 = vld [vmem:[%s711] sm:$0x3]
        %s713 = scalar_lea.vmem %s394, 8 [#allocation7]
        %v714 = vld [vmem:[%s713] sm:$0xf]
        %s715 = scalar_lea.vmem %s403, 8 [#allocation8]
        %v716 = vld [vmem:[%s715] sm:$0xf]
        %s717 = scalar_lea.vmem %s412, 8 [#allocation10]
        %v718 = vld [vmem:[%s717] sm:$0xf]
        %v719 = vadd.f32 %v710, %v712
        %v722 = vunpack.c.l.s4 1966171168
        %v723 = vunpack.c.0.s8 %v722
        %v724 = vlaneseq
        %v725 = vshrl.u32 %v724, 7
        %v726 = vsub.s32 %v723, %v725
        %v727 = vrot.slane %v719, %v726
        %v728 = vcombine.high %v727, %v727
        %v730 = vunpack.c.l.s4 1966171168
        %v731 = vunpack.c.0.s8 %v730
        %v732 = vlaneseq
        %v733 = vshrl.u32 %v732, 7
        %v734 = vsub.s32 %v731, %v733
        %v735 = vrot.slane %v727, %v734
        %v737 = vunpack.c.l.s4 1966171168
        %v738 = vunpack.c.0.s8 %v737
        %v739 = vlaneseq
        %v740 = vshrl.u32 %v739, 7
        %v741 = vsub.s32 %v738, %v740
        %v742 = vrot.slane %v728, %v741
        %v743 = vlaneseq
        %v744 = vshrl.u32 %v743, 7
        %v745 = vsub.s32 0, %v744
        %v746 = vrot.slane %v735, %v745
        %v747 = vlaneseq
        %v748 = vshrl.u32 %v747, 7
        %v749 = vsub.s32 0, %v748
        %v750 = vrot.slane %v742, %v749
        %v753 = vmul.f32 %v746, %v714
        %v754 = vmul.f32 %v750, %v714
        %v757 = vunpack.c.l.s4 1966171168
        %v758 = vunpack.c.0.s8 %v757
        %v759 = vlaneseq
        %v760 = vshrl.u32 %v759, 7
        %v761 = vsub.s32 %v758, %v760
        %v762 = vrot.slane %v712, %v761
        %v763 = vcombine.high %v762, %v762
        %v765 = vunpack.c.l.s4 1966171168
        %v766 = vunpack.c.0.s8 %v765
        %v767 = vlaneseq
        %v768 = vshrl.u32 %v767, 7
        %v769 = vsub.s32 %v766, %v768
        %v770 = vrot.slane %v762, %v769
        %v772 = vunpack.c.l.s4 1966171168
        %v773 = vunpack.c.0.s8 %v772
        %v774 = vlaneseq
        %v775 = vshrl.u32 %v774, 7
        %v776 = vsub.s32 %v773, %v775
        %v777 = vrot.slane %v763, %v776
        %v778 = vlaneseq
        %v779 = vshrl.u32 %v778, 7
        %v780 = vsub.s32 0, %v779
        %v781 = vrot.slane %v770, %v780
        %v782 = vlaneseq
        %v783 = vshrl.u32 %v782, 7
        %v784 = vsub.s32 0, %v783
        %v785 = vrot.slane %v777, %v784
        %v788 = vmul.f32 %v781, %v716
        %v789 = vmul.f32 %v785, %v716
        %v790 = vsub.f32 %v753, %v788
        %v791 = vsub.f32 %v754, %v789
        %v792 = vadd.f32 %v668, %v790
        %v793 = vadd.f32 %v669, %v791
        %v796 = vunpack.c.l.s4 1966171168
        %v797 = vunpack.c.0.s8 %v796
        %v798 = vlaneseq
        %v799 = vshrl.u32 %v798, 7
        %v800 = vsub.s32 %v797, %v799
        %v801 = vrot.slane %v710, %v800
        %v802 = vcombine.high %v801, %v801
        %v804 = vunpack.c.l.s4 1966171168
        %v805 = vunpack.c.0.s8 %v804
        %v806 = vlaneseq
        %v807 = vshrl.u32 %v806, 7
        %v808 = vsub.s32 %v805, %v807
        %v809 = vrot.slane %v801, %v808
        %v811 = vunpack.c.l.s4 1966171168
        %v812 = vunpack.c.0.s8 %v811
        %v813 = vlaneseq
        %v814 = vshrl.u32 %v813, 7
        %v815 = vsub.s32 %v812, %v814
        %v816 = vrot.slane %v802, %v815
        %v817 = vlaneseq
        %v818 = vshrl.u32 %v817, 7
        %v819 = vsub.s32 0, %v818
        %v820 = vrot.slane %v809, %v819
        %v821 = vlaneseq
        %v822 = vshrl.u32 %v821, 7
        %v823 = vsub.s32 0, %v822
        %v824 = vrot.slane %v816, %v823
        %v827 = vmul.f32 %v820, %v718
        %v828 = vmul.f32 %v824, %v718
        %v829 = vadd.f32 %v753, %v827
        %v830 = vadd.f32 %v754, %v828
        %v831 = vadd.f32 %v707, %v829
        %v832 = vadd.f32 %v708, %v830
        %s833 = scalar_lea.vmem %s376, 6 [#allocation2]
        %v834 = vld [vmem:[%s833] sm:$0x3]
        %s835 = scalar_lea.vmem %s385, 6 [#allocation5]
        %v836 = vld [vmem:[%s835] sm:$0x3]
        %s837 = scalar_lea.vmem %s394, 12 [#allocation7]
        %v838 = vld [vmem:[%s837] sm:$0xf]
        %s839 = scalar_lea.vmem %s403, 12 [#allocation8]
        %v840 = vld [vmem:[%s839] sm:$0xf]
        %s841 = scalar_lea.vmem %s412, 12 [#allocation10]
        %v842 = vld [vmem:[%s841] sm:$0xf]
        %v843 = vadd.f32 %v834, %v836
        %v846 = vunpack.c.l.s4 1966171168
        %v847 = vunpack.c.0.s8 %v846
        %v848 = vlaneseq
        %v849 = vshrl.u32 %v848, 7
        %v850 = vsub.s32 %v847, %v849
        %v851 = vrot.slane %v843, %v850
        %v852 = vcombine.high %v851, %v851
        %v854 = vunpack.c.l.s4 1966171168
        %v855 = vunpack.c.0.s8 %v854
        %v856 = vlaneseq
        %v857 = vshrl.u32 %v856, 7
        %v858 = vsub.s32 %v855, %v857
        %v859 = vrot.slane %v851, %v858
        %v861 = vunpack.c.l.s4 1966171168
        %v862 = vunpack.c.0.s8 %v861
        %v863 = vlaneseq
        %v864 = vshrl.u32 %v863, 7
        %v865 = vsub.s32 %v862, %v864
        %v866 = vrot.slane %v852, %v865
        %v867 = vlaneseq
        %v868 = vshrl.u32 %v867, 7
        %v869 = vsub.s32 0, %v868
        %v870 = vrot.slane %v859, %v869
        %v871 = vlaneseq
        %v872 = vshrl.u32 %v871, 7
        %v873 = vsub.s32 0, %v872
        %v874 = vrot.slane %v866, %v873
        %v877 = vmul.f32 %v870, %v838
        %v878 = vmul.f32 %v874, %v838
        %v881 = vunpack.c.l.s4 1966171168
        %v882 = vunpack.c.0.s8 %v881
        %v883 = vlaneseq
        %v884 = vshrl.u32 %v883, 7
        %v885 = vsub.s32 %v882, %v884
        %v886 = vrot.slane %v836, %v885
        %v887 = vcombine.high %v886, %v886
        %v889 = vunpack.c.l.s4 1966171168
        %v890 = vunpack.c.0.s8 %v889
        %v891 = vlaneseq
        %v892 = vshrl.u32 %v891, 7
        %v893 = vsub.s32 %v890, %v892
        %v894 = vrot.slane %v886, %v893
        %v896 = vunpack.c.l.s4 1966171168
        %v897 = vunpack.c.0.s8 %v896
        %v898 = vlaneseq
        %v899 = vshrl.u32 %v898, 7
        %v900 = vsub.s32 %v897, %v899
        %v901 = vrot.slane %v887, %v900
        %v902 = vlaneseq
        %v903 = vshrl.u32 %v902, 7
        %v904 = vsub.s32 0, %v903
        %v905 = vrot.slane %v894, %v904
        %v906 = vlaneseq
        %v907 = vshrl.u32 %v906, 7
        %v908 = vsub.s32 0, %v907
        %v909 = vrot.slane %v901, %v908
        %v912 = vmul.f32 %v905, %v840
        %v913 = vmul.f32 %v909, %v840
        %v914 = vsub.f32 %v877, %v912
        %v915 = vsub.f32 %v878, %v913
        %v916 = vadd.f32 %v792, %v914
        %v917 = vadd.f32 %v793, %v915
        %v920 = vunpack.c.l.s4 1966171168
        %v921 = vunpack.c.0.s8 %v920
        %v922 = vlaneseq
        %v923 = vshrl.u32 %v922, 7
        %v924 = vsub.s32 %v921, %v923
        %v925 = vrot.slane %v834, %v924
        %v926 = vcombine.high %v925, %v925
        %v928 = vunpack.c.l.s4 1966171168
        %v929 = vunpack.c.0.s8 %v928
        %v930 = vlaneseq
        %v931 = vshrl.u32 %v930, 7
        %v932 = vsub.s32 %v929, %v931
        %v933 = vrot.slane %v925, %v932
        %v935 = vunpack.c.l.s4 1966171168
        %v936 = vunpack.c.0.s8 %v935
        %v937 = vlaneseq
        %v938 = vshrl.u32 %v937, 7
        %v939 = vsub.s32 %v936, %v938
        %v940 = vrot.slane %v926, %v939
        %v941 = vlaneseq
        %v942 = vshrl.u32 %v941, 7
        %v943 = vsub.s32 0, %v942
        %v944 = vrot.slane %v933, %v943
        %v945 = vlaneseq
        %v946 = vshrl.u32 %v945, 7
        %v947 = vsub.s32 0, %v946
        %v948 = vrot.slane %v940, %v947
        %v951 = vmul.f32 %v944, %v842
        %v952 = vmul.f32 %v948, %v842
        %v953 = vadd.f32 %v877, %v951
        %v954 = vadd.f32 %v878, %v952
        %v955 = vadd.f32 %v831, %v953
        %v956 = vadd.f32 %v832, %v954
        %957 = vst [vmem:[%s458] sm:$0xf] %v916
        %958 = vst [vmem:[%s458 + $0x4] sm:$0xf] %v917
        %959 = vst [vmem:[%s465] sm:$0xf] %v955
        %960 = vst [vmem:[%s465 + $0x4] sm:$0xf] %v956
        %s961 = sand.u32 %s195, 1
        %s962 = scalar_lea.sflag [#allocation4], %s961
        %s963 = sand.u32 %s195, 1
        %s964 = smul.addr %s963, 8
        %s965 = scalar_lea.vmem [#allocation11], %s964
        %s966 = sand.u32 %s223, 1
        %s967 = scalar_lea.sflag [#allocation13], %s966
        %s968 = sand.u32 %s223, 1
        %s969 = smul.addr %s968, 8
        %s970 = scalar_lea.vmem [#allocation12], %s969
        // Predicated region
        $region61: #{tpu_custom_call.1} parent=39 // pred_check
          %p971 = pneg %p205
        $region62: #{tpu_custom_call.1} parent=39 // pred_check_branch
          %973 = sbr.rel (%p971) target = $region64
        $region63: #{tpu_custom_call.1} parent=39 // pred_region
          %s975 = ssub.s32 128, 128
          %976 = vsyncadd %s962, %s975
          %s977 = smul.addr %s37, 2
          %s978 = sadd.s32 %s38, %s977
          %s979 = smul.addr %s978, 64
          %s980 = scalar_lea.hbm %s5, %s979
          %s981 = sshll.u32 %s965, 4
          %s982 = int_to_ptr.vmem [resolvable:$true] %s981
          %987 = dma.vmem_to_hbm [thread:$0]  %s982, 128, %s980, %s962, 64, 64, 4
        $region64: #{tpu_custom_call.1} parent=39 // pred_fallthru
          _
        // Predicated region
        $region65: #{tpu_custom_call.1} parent=39 // pred_check
          %p988 = pneg %p233
        $region66: #{tpu_custom_call.1} parent=39 // pred_check_branch
          %990 = sbr.rel (%p988) target = $region68
        $region67: #{tpu_custom_call.1} parent=39 // pred_region
          %s992 = ssub.s32 128, 128
          %993 = vsyncadd %s967, %s992
          %s994 = smul.addr %s37, 2
          %s995 = sadd.s32 %s38, %s994
          %s996 = smul.addr %s995, 64
          %s997 = scalar_lea.hbm %s6, %s996
          %s998 = sshll.u32 %s970, 4
          %s999 = int_to_ptr.vmem [resolvable:$true] %s998
          %1004 = dma.vmem_to_hbm [thread:$0]  %s999, 128, %s997, %s967, 64, 64, 4
        $region68: #{tpu_custom_call.1} parent=39 // pred_fallthru
          _
      $region40: #{tpu_custom_call.1} parent=5 // pred_fallthru
        _
      %p1005 = scmp.le.s32.totalorder 2, %s28
      // Predicated region
      $region69: #{tpu_custom_call.1} parent=5 // pred_check
        %p1006 = pneg %p1005
      $region70: #{tpu_custom_call.1} parent=5 // pred_check_branch
        %1008 = sbr.rel (%p1006) target = $region72
      $region71: #{tpu_custom_call.1} parent=5 // pred_region
        %s1009 = ssub.s32 %s28, 2
        // Predicated region
        $region73: #{tpu_custom_call.1} parent=71 // pred_check
          %p1010 = pneg %p211
        $region74: #{tpu_custom_call.1} parent=71 // pred_check_branch
          %1012 = sbr.rel (%p1010) target = $region76
        $region75: #{tpu_custom_call.1} parent=71 // pred_region
          %s1013 = sand.u32 %s196, 1
          %s1014 = scalar_lea.sflag [#allocation4], %s1013
          %s1015 = sand.u32 %s196, 1
          %s1016 = smul.addr %s1015, 8
          %s1017 = scalar_lea.vmem [#allocation11], %s1016
          %1018 = dma.done %s1014, 128
        $region76: #{tpu_custom_call.1} parent=71 // pred_fallthru
          _
        // Predicated region
        $region77: #{tpu_custom_call.1} parent=71 // pred_check
          %p1019 = pneg %p239
        $region78: #{tpu_custom_call.1} parent=71 // pred_check_branch
          %1021 = sbr.rel (%p1019) target = $region80
        $region79: #{tpu_custom_call.1} parent=71 // pred_region
          %s1022 = sand.u32 %s224, 1
          %s1023 = scalar_lea.sflag [#allocation13], %s1022
          %s1024 = sand.u32 %s224, 1
          %s1025 = smul.addr %s1024, 8
          %s1026 = scalar_lea.vmem [#allocation12], %s1025
          %1027 = dma.done %s1023, 128
        $region80: #{tpu_custom_call.1} parent=71 // pred_fallthru
          _
      $region72: #{tpu_custom_call.1} parent=5 // pred_fallthru
        _
    $region6: #{tpu_custom_call.1} parent=1 // loop_footer
      %s32 = sadd.s32 1, %s28
    $region7: #{tpu_custom_call.1} parent=1 // loop_footer_branch
      %27 = sbr.rel target = $region3
    $region8: #{tpu_custom_call.1} parent=1 // loop_exit
      _
    %1028 = vsyncpa [#allocation3], 1
    %s1029 = scalar_lea.sflag [#allocation3], 1
    %1030 = vsyncpa %s1029, 1
    %1031 = vsyncpa [#allocation6], 1
    %s1032 = scalar_lea.sflag [#allocation6], 1
    %1033 = vsyncpa %s1032, 1
    %1034 = vsyncpa [#allocation9], 1
    %s1035 = scalar_lea.sflag [#allocation9], 1
    %1036 = vsyncpa %s1035, 1
    %1037 = vsyncpa [#allocation4], 1
    %s1038 = scalar_lea.sflag [#allocation4], 1
    %1039 = vsyncpa %s1038, 1
    %1040 = vsyncpa [#allocation13], 1
    %s1041 = scalar_lea.sflag [#allocation13], 1
    %1042 = vsyncpa %s1041, 1

</llo_original>
